<compile_context>
chip_gen: v6e
topology: v6e:2x2x1
jax: 0.10.0
libtpu: 0.0.40
codegen_flags: <defaults>
</compile_context>

<pallas_src>
import functools

import jax
import jax.numpy as jnp
from jax import lax
from jax.experimental import pallas as pl
from jax.experimental.pallas import tpu as pltpu


def _maxpool_kernel(x_ref, o_ref, *, kk: int):
    """Pool one (kk, b_t, l_t) input block into a (b_t, l_t) output block.

    x_ref[j*k + j2, bi, ho*Wo + wo] holds x[bi, ho*k + j, wo*k + j2], so both
    pooling axes collapse into the leading window-offset axis: the pool is
    kk-1 aligned vmax ops over identically-shaped (b_t, l_t) slabs.
    """
    m = x_ref[0]
    for j in range(1, kk):
        m = jnp.maximum(m, x_ref[j])
    o_ref[...] = m


def _choose_tiles(B: int, L: int, kk: int, itemsize: int):
    """Pick block sizes (b_t, l_t) for the (kk, B, L) pooled layout.

    VMEM is accounted as 2*(input block + output block) (double buffering),
    with dtype-aware sublane padding.  Targets ~4 MiB input blocks and tries
    to expose >= 8 grid steps (v7x megacore + pipeline depth) without letting
    blocks drop below ~1 MiB.
    """
    SUB = {4: 8, 2: 16, 1: 32}.get(itemsize, 8)   # sublane tile per dtype
    LANE = 128
    ceil_to = lambda n, m: -(-n // m) * m

    TARGET_IN = 4 << 20      # ~4 MiB of input per block (mem-bound sweet spot)
    VMEM_CAP = 24 << 20      # 2*(in+out) double-buffered blocks; safe on v7x
    MIN_IN = 1 << 20         # don't shrink below ~1 MiB just to add steps

    def in_bytes(bt, lt):
        return kk * ceil_to(bt, SUB) * ceil_to(lt, LANE) * itemsize

    def pipe_bytes(bt, lt):  # double-buffered input + output VMEM footprint
        return 2 * (kk + 1) * ceil_to(bt, SUB) * ceil_to(lt, LANE) * itemsize

    b_t, l_t = B, L

    # 1) Tile the lane axis (multiples of 128, or all of L) toward the target.
    if in_bytes(b_t, l_t) > TARGET_IN and L > LANE:
        col = in_bytes(b_t, LANE)                  # one full-B 128-lane column
        l_t = max(1, TARGET_IN // col) * LANE
        if l_t >= L:
            l_t = L

    # 2) If a single full-B column still busts the VMEM cap, tile B as well.
    if pipe_bytes(b_t, l_t) > VMEM_CAP:
        l_t = L if L <= LANE else LANE
        row = pipe_bytes(SUB, l_t)                 # one SUB-row block
        b_t = max(1, VMEM_CAP // row) * SUB
        if b_t >= B:
            b_t = B

    # 3) Expose enough grid steps for pipelining / v7x megacore when possible.
    n_steps = lambda bt, lt: pl.cdiv(B, bt) * pl.cdiv(L, lt)
    while n_steps(b_t, l_t) < 8 and l_t > LANE:
        cand = max(1, (ceil_to(l_t, LANE) // LANE) // 2) * LANE
        if cand == l_t or in_bytes(b_t, cand) < MIN_IN:
            break
        l_t = cand

    return b_t, l_t


@functools.partial(jax.jit, static_argnames=("kernel_size",))
def zhuzhu_forward(x: jax.Array, kernel_size: int = 3) -> jax.Array:
    """Equivalent of Zhuzhu.forward: MaxPool2d(kernel_size=3, ceil_mode=False)."""
    N, C, H, W = x.shape
    k = kernel_size
    Ho, Wo = H // k, W // k                 # floor mode (ceil_mode=False)
    assert Ho > 0 and Wo > 0, "input spatially smaller than the pooling window"
    B, L, kk = N * C, Ho * Wo, k * k
    itemsize = jnp.dtype(x.dtype).itemsize

    # ---- layout plumbing ---------------------------------------------------
    # Window offsets (j, j2) go to a single leading axis; (B, Ho, Wo) is
    # flattened so the pooled result *is* the row-major NCHW output: only ONE
    # real XLA transpose on the input and NO output transpose.
    # TODO(synk): an NCHW-native variant (W on lanes, sublane H-slabs,
    # pltpu.roll + stride-k lane compaction for the W window) would also drop
    # the input transpose pass; benchmark per generation before switching.
    xw = x.reshape(B, H, W)[:, : Ho * k, : Wo * k]     # crop to full windows
    xw = xw.reshape(B, Ho, k, Wo, k)                   # free row-major reshape
    xt = jnp.transpose(xw, (2, 4, 0, 1, 3)).reshape(kk, B, L)

    # ---- tiling --------------------------------------------------------------
    b_t, l_t = _choose_tiles(B, L, kk, itemsize)
    grid = (pl.cdiv(B, b_t), pl.cdiv(L, l_t))

    out = pl.pallas_call(
        functools.partial(_maxpool_kernel, kk=kk),
        out_shape=jax.ShapeDtypeStruct((B, L), x.dtype),
        grid=grid,
        in_specs=[pl.BlockSpec((kk, b_t, l_t), lambda bi, li: (0, bi, li))],
        out_specs=pl.BlockSpec((b_t, l_t), lambda bi, li: (bi, li)),
        compiler_params=pltpu.CompilerParams(
            dimension_semantics=("parallel", "parallel"),  # v7x megacore sharding
            vmem_limit_bytes=32 * 1024 * 1024,             # covers the 24 MiB cap
        ),
    )(xt)

    # Free row-major reshape back to NCHW (no transpose needed).
    return out.reshape(N, C, Ho, Wo)


if __name__ == "__main__":
    key = jax.random.PRNGKey(0)
    # Small NCHW input consistent with an image-style MaxPool2d module.
    x = jax.random.normal(key, (2, 4, 16, 16), dtype=jnp.float32)

    y = zhuzhu_forward(x, kernel_size=3)
    y = jax.block_until_ready(y)

    # Pure-JAX reference (same semantics as torch MaxPool2d(3, ceil_mode=False)).
    ref = lax.reduce_window(
        x, -jnp.inf, lax.max,
        window_dimensions=(1, 1, 3, 3),
        window_strides=(1, 1, 3, 3),
        padding="VALID",
    )

    assert y.shape == (2, 4, 5, 5), y.shape
    assert jnp.allclose(y, ref), "mismatch vs reference max pool"
    print("KERNEL_OK")
</pallas_src>

<mosaic_0001>
module attributes {stable_mosaic.version = 11 : i64} {
  func.func @_maxpool_kernel(%arg0: i32, %arg1: i32, %arg2: memref<9x8x25xf32, #tpu.memory_space<vmem>>, %arg3: memref<8x25xf32, #tpu.memory_space<vmem>>) attributes {dimension_semantics = [#tpu.dimension_semantics<parallel>, #tpu.dimension_semantics<parallel>], iteration_bounds = array<i64: 1, 1>, scalar_prefetch = 0 : i64, scratch_operands = 0 : i64, tpu.core_type = #tpu.core_type<tc>, window_params = [{transform_indices = @transform_0, window_bounds = array<i64: 9, 8, 25>}, {transform_indices = @transform_1, window_bounds = array<i64: 8, 25>}]} {
    %c0 = arith.constant 0 : index
    %c0_0 = arith.constant 0 : index
    %c0_1 = arith.constant 0 : index
    %0 = vector.load %arg2[%c0, %c0_0, %c0_1] : memref<9x8x25xf32, #tpu.memory_space<vmem>>, vector<1x8x25xf32>
    %1 = vector.shape_cast %0 : vector<1x8x25xf32> to vector<8x25xf32>
    %c1 = arith.constant 1 : index
    %c0_2 = arith.constant 0 : index
    %c0_3 = arith.constant 0 : index
    %2 = vector.load %arg2[%c1, %c0_2, %c0_3] : memref<9x8x25xf32, #tpu.memory_space<vmem>>, vector<1x8x25xf32>
    %3 = vector.shape_cast %2 : vector<1x8x25xf32> to vector<8x25xf32>
    %4 = arith.maximumf %1, %3 : vector<8x25xf32>
    %c2 = arith.constant 2 : index
    %c0_4 = arith.constant 0 : index
    %c0_5 = arith.constant 0 : index
    %5 = vector.load %arg2[%c2, %c0_4, %c0_5] : memref<9x8x25xf32, #tpu.memory_space<vmem>>, vector<1x8x25xf32>
    %6 = vector.shape_cast %5 : vector<1x8x25xf32> to vector<8x25xf32>
    %7 = arith.maximumf %4, %6 : vector<8x25xf32>
    %c3 = arith.constant 3 : index
    %c0_6 = arith.constant 0 : index
    %c0_7 = arith.constant 0 : index
    %8 = vector.load %arg2[%c3, %c0_6, %c0_7] : memref<9x8x25xf32, #tpu.memory_space<vmem>>, vector<1x8x25xf32>
    %9 = vector.shape_cast %8 : vector<1x8x25xf32> to vector<8x25xf32>
    %10 = arith.maximumf %7, %9 : vector<8x25xf32>
    %c4 = arith.constant 4 : index
    %c0_8 = arith.constant 0 : index
    %c0_9 = arith.constant 0 : index
    %11 = vector.load %arg2[%c4, %c0_8, %c0_9] : memref<9x8x25xf32, #tpu.memory_space<vmem>>, vector<1x8x25xf32>
    %12 = vector.shape_cast %11 : vector<1x8x25xf32> to vector<8x25xf32>
    %13 = arith.maximumf %10, %12 : vector<8x25xf32>
    %c5 = arith.constant 5 : index
    %c0_10 = arith.constant 0 : index
    %c0_11 = arith.constant 0 : index
    %14 = vector.load %arg2[%c5, %c0_10, %c0_11] : memref<9x8x25xf32, #tpu.memory_space<vmem>>, vector<1x8x25xf32>
    %15 = vector.shape_cast %14 : vector<1x8x25xf32> to vector<8x25xf32>
    %16 = arith.maximumf %13, %15 : vector<8x25xf32>
    %c6 = arith.constant 6 : index
    %c0_12 = arith.constant 0 : index
    %c0_13 = arith.constant 0 : index
    %17 = vector.load %arg2[%c6, %c0_12, %c0_13] : memref<9x8x25xf32, #tpu.memory_space<vmem>>, vector<1x8x25xf32>
    %18 = vector.shape_cast %17 : vector<1x8x25xf32> to vector<8x25xf32>
    %19 = arith.maximumf %16, %18 : vector<8x25xf32>
    %c7 = arith.constant 7 : index
    %c0_14 = arith.constant 0 : index
    %c0_15 = arith.constant 0 : index
    %20 = vector.load %arg2[%c7, %c0_14, %c0_15] : memref<9x8x25xf32, #tpu.memory_space<vmem>>, vector<1x8x25xf32>
    %21 = vector.shape_cast %20 : vector<1x8x25xf32> to vector<8x25xf32>
    %22 = arith.maximumf %19, %21 : vector<8x25xf32>
    %c8 = arith.constant 8 : index
    %c0_16 = arith.constant 0 : index
    %c0_17 = arith.constant 0 : index
    %23 = vector.load %arg2[%c8, %c0_16, %c0_17] : memref<9x8x25xf32, #tpu.memory_space<vmem>>, vector<1x8x25xf32>
    %24 = vector.shape_cast %23 : vector<1x8x25xf32> to vector<8x25xf32>
    %25 = arith.maximumf %22, %24 : vector<8x25xf32>
    %c0_18 = arith.constant 0 : index
    %c0_19 = arith.constant 0 : index
    %26 = vector.load %arg3[%c0_18, %c0_19] : memref<8x25xf32, #tpu.memory_space<vmem>>, vector<8x25xf32>
    tpu.vector_store %arg3[%c0_18, %c0_19], %25 {strides = array<i32>} : memref<8x25xf32, #tpu.memory_space<vmem>>, vector<8x25xf32>,
    return
  }
  func.func @transform_0(%arg0: i32, %arg1: i32) -> (i32, i32, i32) {
    %c0_i32 = arith.constant 0 : i32
    %c0_i32_0 = arith.constant 0 : i32
    return %c0_i32, %arg0, %arg1 : i32, i32, i32
  }
  func.func @transform_1(%arg0: i32, %arg1: i32) -> (i32, i32) {
    %c0_i32 = arith.constant 0 : i32
    return %arg0, %arg1 : i32, i32
  }
}

</mosaic_0001>

<llo_original>
// kernel: zhuzhu_forward.1
$region0: #{zhuzhu_forward.1}
  #allocation0 [shape = 'u32[]', space=smem, size = 0x4, offset = 0x4, fixed_abs, tag = 'smem constant byte address 0x4 - core index']
  #allocation1 [shape = 'u32[144,128]{1,0:T(1,128)}', space=vmem, size = 0x12000, scoped, tag = 'internal scratch']
  %s0 = inlined_call_operand.vmem [shape: f32[9,8,25], index: 0, kind: input, shape index: {}]
  %s1 = inlined_call_operand.vmem [shape: f32[8,25], index: 1, kind: output, shape index: {}]
  %s2 = sld [smem:[#allocation0]]
  $region14: #{zhuzhu_forward.1} parent=0
    _
  %s4 = ssub.s32 1, %s2
  %s5 = scalar_select 0, %s4, %s2
  // Predicated region
  $region2: #{zhuzhu_forward.1} parent=0 // pred_check
    _
  $region3: #{zhuzhu_forward.1} parent=0 // pred_check_branch
    %7 = sbr.rel (0) target = $region5
  $region4: #{zhuzhu_forward.1} parent=0 // pred_region
    _
  $region5: #{zhuzhu_forward.1} parent=0 // pred_fallthru
    _
  %v8 = vld [vmem:[%s0] sm:$0xff]
  %s9 = scalar_lea.vmem %s0, 8
  %v10 = vld [vmem:[%s9] sm:$0xff]
  %v11 = vmax.f32 %v8, %v10
  %s12 = scalar_lea.vmem %s0, 16
  %v13 = vld [vmem:[%s12] sm:$0xff]
  %v14 = vmax.f32 %v11, %v13
  %s15 = scalar_lea.vmem %s0, 24
  %v16 = vld [vmem:[%s15] sm:$0xff]
  %v17 = vmax.f32 %v14, %v16
  %s18 = scalar_lea.vmem %s0, 32
  %v19 = vld [vmem:[%s18] sm:$0xff]
  %v20 = vmax.f32 %v17, %v19
  %s21 = scalar_lea.vmem %s0, 40
  %v22 = vld [vmem:[%s21] sm:$0xff]
  %v23 = vmax.f32 %v20, %v22
  %s24 = scalar_lea.vmem %s0, 48
  %v25 = vld [vmem:[%s24] sm:$0xff]
  %v26 = vmax.f32 %v23, %v25
  %s27 = scalar_lea.vmem %s0, 56
  %v28 = vld [vmem:[%s27] sm:$0xff]
  %v29 = vmax.f32 %v26, %v28
  %s30 = scalar_lea.vmem %s0, 64
  %v31 = vld [vmem:[%s30] sm:$0xff]
  %v32 = vmax.f32 %v29, %v31
  %vm33 = vcmask 203776
  %34 = vst.msk [vmem:[%s1] sm:$0xff] %vm33, %v32
  // Predicated region
  $region6: #{zhuzhu_forward.1} parent=0 // pred_check
    _
  $region7: #{zhuzhu_forward.1} parent=0 // pred_check_branch
    %36 = sbr.rel (0) target = $region9
  $region8: #{zhuzhu_forward.1} parent=0 // pred_region
    _
  $region9: #{zhuzhu_forward.1} parent=0 // pred_fallthru
    _
  // Predicated region
  $region10: #{zhuzhu_forward.1} parent=0 // pred_check
    _
  $region11: #{zhuzhu_forward.1} parent=0 // pred_check_branch
    %38 = sbr.rel (0) target = $region13
  $region12: #{zhuzhu_forward.1} parent=0 // pred_region
    _
  $region13: #{zhuzhu_forward.1} parent=0 // pred_fallthru
    _

</llo_original>
